<compile_context>
chip_gen: v7x
topology: tpu7x:2x2x1
jax: 0.10.0
libtpu: 0.0.40
codegen_flags: <defaults>
</compile_context>

<pallas_src>
import functools

import jax
import jax.numpy as jnp
from jax import lax
from jax.experimental import pallas as pl
from jax.experimental.pallas import tpu as pltpu


def _cac_loss_kernel(dist_ref, gt_ref, total_ref, anchor_ref, tuplet_ref,
                     sum_true_ref, sum_log_ref, *, lbda, batch_size, block_b):
    step = pl.program_id(0)
    nsteps = pl.num_programs(0)

    @pl.when(step == 0)
    def _init():
        sum_true_ref[...] = jnp.zeros_like(sum_true_ref)
        sum_log_ref[...] = jnp.zeros_like(sum_log_ref)

    d = dist_ref[...].astype(jnp.float32)             # (TB, C) in f32
    labels = gt_ref[...]                              # (TB, 1) int32
    tb, c = d.shape

    # Row-validity mask for a ragged last tile (global row index < B).
    row = step * block_b + lax.broadcasted_iota(jnp.int32, (tb, 1), 0)
    valid = row < batch_size                          # (TB, 1) bool

    # Zero padded rows so every exp below stays finite regardless of pad data.
    d = jnp.where(valid, d, 0.0)

    # One-hot mask of the ground-truth class per row; gather via masked row-sum.
    col = lax.broadcasted_iota(jnp.int32, (tb, c), 1)
    is_gt = col == labels                             # (TB, C) bool
    true_col = jnp.sum(jnp.where(is_gt, d, 0.0), axis=1, keepdims=True)  # (TB, 1)

    # exp(true - d) contributes exactly exp(0)=1 at the gt column, so the sum
    # over "other" classes is the full row sum minus 1 (no second select).
    row_sum = jnp.sum(jnp.exp(true_col - d), axis=1, keepdims=True) - 1.0  # (TB, 1)
    log_term = jnp.log(1.0 + row_sum)                                      # (TB, 1)

    sum_true_ref[...] += jnp.sum(jnp.where(valid, true_col, 0.0), keepdims=True)
    sum_log_ref[...] += jnp.sum(jnp.where(valid, log_term, 0.0), keepdims=True)

    @pl.when(step == nsteps - 1)
    def _finalize():
        inv_b = 1.0 / float(batch_size)
        anchor = sum_true_ref[...] * inv_b
        tuplet = sum_log_ref[...] * inv_b
        anchor_ref[...] = anchor
        tuplet_ref[...] = tuplet
        total_ref[...] = lbda * anchor + tuplet


def _choose_block_b(B, C, itemsize):
    """Largest batch tile whose double-buffered input fits comfortably in VMEM
    on every generation (v5e 16 MiB scoped default is the tightest; v7x has
    64 MiB physical)."""
    per_buffer_budget = 6 * 1024 * 1024          # ~12 MiB once double-buffered
    rows = per_buffer_budget // max(1, C * itemsize)
    if rows >= B:
        return B                                  # single resident block
    tb = max(512, (rows // 512) * 512)            # >=512 rows, multiple of 512
    return min(tb, B)


def cac_loss(distances, gt, *, lbda=0.1, block_b=None):
    """distances: (B, C) float array (any float dtype); gt: (B,) int labels.
    Returns (total, (anchor, tuplet)) as f32 scalars."""
    B, C = distances.shape
    itemsize = jnp.dtype(distances.dtype).itemsize
    gt2d = gt.reshape(B, 1).astype(jnp.int32)

    tb = _choose_block_b(B, C, itemsize) if block_b is None else int(block_b)
    num_steps = pl.cdiv(B, tb)

    kernel = functools.partial(
        _cac_loss_kernel, lbda=float(lbda), batch_size=B, block_b=tb)

    out_shape = (
        jax.ShapeDtypeStruct((1, 1), jnp.float32),  # total
        jax.ShapeDtypeStruct((1, 1), jnp.float32),  # anchor
        jax.ShapeDtypeStruct((1, 1), jnp.float32),  # tuplet
    )

    cost = pl.CostEstimate(
        flops=8 * B * C,
        transcendentals=B * C + 2 * B,              # exp per element + log per row
        bytes_accessed=B * C * itemsize + B * 4 + 3 * 4,
    )

    total, anchor, tuplet = pl.pallas_call(
        kernel,
        out_shape=out_shape,
        grid=(num_steps,),
        in_specs=[
            pl.BlockSpec((tb, C), lambda i: (i, 0)),   # distances, streamed over B
            pl.BlockSpec((tb, 1), lambda i: (i, 0)),   # gt labels
        ],
        out_specs=(
            pl.BlockSpec((1, 1), lambda i: (0, 0)),
            pl.BlockSpec((1, 1), lambda i: (0, 0)),
            pl.BlockSpec((1, 1), lambda i: (0, 0)),
        ),
        scratch_shapes=[
            pltpu.VMEM((1, 1), jnp.float32),           # running sum of `true`
            pltpu.VMEM((1, 1), jnp.float32),           # running sum of log terms
        ],
        compiler_params=pltpu.CompilerParams(
            dimension_semantics=("arbitrary",),        # batch axis is a reduction
        ),
        cost_estimate=cost,
    )(distances, gt2d)                                 # native dtype, no upcast

    return total[0, 0], (anchor[0, 0], tuplet[0, 0])


def _cac_loss_ref(distances, gt, *, lbda=0.1):
    """Pure-JAX reference replicating the PyTorch forward exactly."""
    d = distances.astype(jnp.float32)
    B, C = d.shape
    true = jnp.take_along_axis(d, gt.reshape(-1, 1), axis=1).reshape(-1)   # (B,)
    onehot = jax.nn.one_hot(gt, C, dtype=bool)
    expo = jnp.exp(-d + true[:, None])
    others_sum = jnp.sum(jnp.where(onehot, 0.0, expo), axis=1)
    anchor = jnp.mean(true)
    tuplet = jnp.mean(jnp.log(1.0 + others_sum))
    total = lbda * anchor + tuplet
    return total, (anchor, tuplet)


if __name__ == "__main__":
    key = jax.random.PRNGKey(0)
    k1, k2, k3, k4, k5, k6 = jax.random.split(key, 6)
    lbda = 0.1

    # Case 1: small single-block case (B=8, num_known_classes=4), f32.
    B1, C1 = 8, 4
    d1 = jnp.abs(jax.random.normal(k1, (B1, C1), dtype=jnp.float32)) * 3.0
    g1 = jax.random.randint(k2, (B1,), 0, C1, dtype=jnp.int32)
    t1, (a1, u1) = cac_loss(d1, g1, lbda=lbda)
    jax.block_until_ready(t1)
    rt1, (ra1, ru1) = _cac_loss_ref(d1, g1, lbda=lbda)
    assert jnp.allclose(t1, rt1, rtol=1e-5, atol=1e-5), (t1, rt1)
    assert jnp.allclose(a1, ra1, rtol=1e-5, atol=1e-5), (a1, ra1)
    assert jnp.allclose(u1, ru1, rtol=1e-5, atol=1e-5), (u1, ru1)

    # Case 2: streamed batch with a ragged last tile (B=20, 8-row tiles).
    B2, C2 = 20, 4
    d2 = jnp.abs(jax.random.normal(k3, (B2, C2), dtype=jnp.float32)) * 3.0
    g2 = jax.random.randint(k4, (B2,), 0, C2, dtype=jnp.int32)
    t2, (a2, u2) = cac_loss(d2, g2, lbda=lbda, block_b=8)
    jax.block_until_ready(t2)
    rt2, (ra2, ru2) = _cac_loss_ref(d2, g2, lbda=lbda)
    assert jnp.allclose(t2, rt2, rtol=1e-5, atol=1e-5), (t2, rt2)
    assert jnp.allclose(a2, ra2, rtol=1e-5, atol=1e-5), (a2, ra2)
    assert jnp.allclose(u2, ru2, rtol=1e-5, atol=1e-5), (u2, ru2)

    # Case 3: native bf16 distances fed straight to the kernel (no wrapper upcast).
    B3, C3 = 16, 4
    d3 = (jnp.abs(jax.random.normal(k5, (B3, C3), dtype=jnp.float32)) * 3.0
          ).astype(jnp.bfloat16)
    g3 = jax.random.randint(k6, (B3,), 0, C3, dtype=jnp.int32)
    t3, (a3, u3) = cac_loss(d3, g3, lbda=lbda)
    jax.block_until_ready(t3)
    rt3, (ra3, ru3) = _cac_loss_ref(d3, g3, lbda=lbda)   # ref also upcasts bf16->f32
    assert jnp.allclose(t3, rt3, rtol=1e-5, atol=1e-5), (t3, rt3)
    assert jnp.allclose(a3, ra3, rtol=1e-5, atol=1e-5), (a3, ra3)
    assert jnp.allclose(u3, ru3, rtol=1e-5, atol=1e-5), (u3, ru3)

    print("KERNEL_OK")
</pallas_src>

<mosaic_0001>
module attributes {stable_mosaic.version = 11 : i64} {
  func.func @_cac_loss_kernel(%arg0: i32, %arg1: memref<8x4xf32, #tpu.memory_space<vmem>>, %arg2: memref<8x1xi32, #tpu.memory_space<vmem>>, %arg3: memref<1x1xf32, #tpu.memory_space<vmem>>, %arg4: memref<1x1xf32, #tpu.memory_space<vmem>>, %arg5: memref<1x1xf32, #tpu.memory_space<vmem>>, %arg6: memref<1x1xf32, #tpu.memory_space<vmem>>, %arg7: memref<1x1xf32, #tpu.memory_space<vmem>>) attributes {dimension_semantics = [#tpu.dimension_semantics<arbitrary>], iteration_bounds = array<i64: 1>, scalar_prefetch = 0 : i64, scratch_operands = 2 : i64, tpu.core_type = #tpu.core_type<tc>, window_params = [{transform_indices = @transform_0, window_bounds = array<i64: 8, 4>}, {transform_indices = @transform_1, window_bounds = array<i64: 8, 1>}, {pipeline_mode = #tpu.pipeline_mode<synchronous>, transform_indices = @transform_2, window_bounds = array<i64: 1, 1>}, {pipeline_mode = #tpu.pipeline_mode<synchronous>, transform_indices = @transform_3, window_bounds = array<i64: 1, 1>}, {pipeline_mode = #tpu.pipeline_mode<synchronous>, transform_indices = @transform_4, window_bounds = array<i64: 1, 1>}]} {
    %c0_i32 = arith.constant 0 : i32
    %0 = arith.cmpi eq, %arg0, %c0_i32 : i32
    %1 = arith.extui %0 : i1 to i32
    %c0_i32_0 = arith.constant 0 : i32
    %2 = arith.cmpi ne, %1, %c0_i32_0 : i32
    scf.if %2 {
      %cst_24 = arith.constant 0.000000e+00 : f32
      %55 = vector.broadcast %cst_24 : f32 to vector<1x1xf32>
      %c0_25 = arith.constant 0 : index
      %c0_26 = arith.constant 0 : index
      %56 = vector.load %arg6[%c0_25, %c0_26] : memref<1x1xf32, #tpu.memory_space<vmem>>, vector<1x1xf32>
      tpu.vector_store %arg6[%c0_25, %c0_26], %55 {strides = array<i32>} : memref<1x1xf32, #tpu.memory_space<vmem>>, vector<1x1xf32>,
      %cst_27 = arith.constant 0.000000e+00 : f32
      %57 = vector.broadcast %cst_27 : f32 to vector<1x1xf32>
      %c0_28 = arith.constant 0 : index
      %c0_29 = arith.constant 0 : index
      %58 = vector.load %arg7[%c0_28, %c0_29] : memref<1x1xf32, #tpu.memory_space<vmem>>, vector<1x1xf32>
      tpu.vector_store %arg7[%c0_28, %c0_29], %57 {strides = array<i32>} : memref<1x1xf32, #tpu.memory_space<vmem>>, vector<1x1xf32>,
    } else {
    }
    %c0 = arith.constant 0 : index
    %c0_1 = arith.constant 0 : index
    %3 = vector.load %arg1[%c0, %c0_1] : memref<8x4xf32, #tpu.memory_space<vmem>>, vector<8x4xf32>
    %c0_2 = arith.constant 0 : index
    %c0_3 = arith.constant 0 : index
    %4 = vector.load %arg2[%c0_2, %c0_3] : memref<8x1xi32, #tpu.memory_space<vmem>>, vector<8x1xi32>
    %c8_i32 = arith.constant 8 : i32
    %5 = arith.muli %arg0, %c8_i32 : i32
    %6 = tpu.iota {dimensions = array<i32: 0>} : vector<8x1xi32>
    %7 = vector.broadcast %5 : i32 to vector<8x1xi32>
    %8 = arith.addi %7, %6 : vector<8x1xi32>
    %c8_i32_4 = arith.constant 8 : i32
    %9 = vector.broadcast %c8_i32_4 : i32 to vector<8x1xi32>
    %10 = arith.cmpi slt, %8, %9 : vector<8x1xi32>
    %cst = arith.constant 0.000000e+00 : f32
    %11 = vector.shape_cast %10 : vector<8x1xi1> to vector<8x1xi1>
    %12 = vector.broadcast %11 : vector<8x1xi1> to vector<8x4xi1>
    %13 = vector.broadcast %cst : f32 to vector<8x4xf32>
    %14 = arith.select %12, %3, %13 : vector<8x4xi1>, vector<8x4xf32>
    %15 = tpu.iota {dimensions = array<i32: 1>} : vector<8x4xi32>
    %16 = vector.broadcast %4 : vector<8x1xi32> to vector<8x4xi32>
    %17 = arith.cmpi eq, %15, %16 : vector<8x4xi32>
    %cst_5 = arith.constant 0.000000e+00 : f32
    %18 = vector.broadcast %cst_5 : f32 to vector<8x4xf32>
    %19 = arith.select %17, %14, %18 : vector<8x4xi1>, vector<8x4xf32>
    %cst_6 = arith.constant dense<0.000000e+00> : vector<8xf32>
    %20 = vector.multi_reduction <add>, %19, %cst_6 [1] : vector<8x4xf32> to vector<8xf32>
    %21 = vector.shape_cast %20 : vector<8xf32> to vector<8x1xf32>
    %22 = vector.broadcast %21 : vector<8x1xf32> to vector<8x4xf32>
    %23 = arith.subf %22, %14 : vector<8x4xf32>
    %24 = math.exp %23 : vector<8x4xf32>
    %cst_7 = arith.constant dense<0.000000e+00> : vector<8xf32>
    %25 = vector.multi_reduction <add>, %24, %cst_7 [1] : vector<8x4xf32> to vector<8xf32>
    %26 = vector.shape_cast %25 : vector<8xf32> to vector<8x1xf32>
    %cst_8 = arith.constant 1.000000e+00 : f32
    %27 = vector.broadcast %cst_8 : f32 to vector<8x1xf32>
    %28 = arith.subf %26, %27 : vector<8x1xf32>
    %cst_9 = arith.constant 1.000000e+00 : f32
    %29 = vector.broadcast %cst_9 : f32 to vector<8x1xf32>
    %30 = arith.addf %29, %28 : vector<8x1xf32>
    %31 = math.log %30 : vector<8x1xf32>
    %c0_10 = arith.constant 0 : index
    %c0_11 = arith.constant 0 : index
    %32 = vector.load %arg6[%c0_10, %c0_11] : memref<1x1xf32, #tpu.memory_space<vmem>>, vector<1x1xf32>
    %cst_12 = arith.constant 0.000000e+00 : f32
    %33 = vector.broadcast %cst_12 : f32 to vector<8x1xf32>
    %34 = arith.select %10, %21, %33 : vector<8x1xi1>, vector<8x1xf32>
    %35 = vector.shape_cast %34 : vector<8x1xf32> to vector<1x8x1xf32>
    %cst_13 = arith.constant dense<0.000000e+00> : vector<1xf32>
    %36 = vector.multi_reduction <add>, %35, %cst_13 [1, 2] : vector<1x8x1xf32> to vector<1xf32>
    %37 = vector.shape_cast %36 : vector<1xf32> to vector<1x1x1xf32>
    %38 = vector.extract %37[0, 0, 0] : f32 from vector<1x1x1xf32>
    %39 = vector.broadcast %38 : f32 to vector<1x1xf32>
    %40 = arith.addf %32, %39 : vector<1x1xf32>
    %c0_14 = arith.constant 0 : index
    %c0_15 = arith.constant 0 : index
    %41 = vector.load %arg6[%c0_14, %c0_15] : memref<1x1xf32, #tpu.memory_space<vmem>>, vector<1x1xf32>
    tpu.vector_store %arg6[%c0_14, %c0_15], %40 {strides = array<i32>} : memref<1x1xf32, #tpu.memory_space<vmem>>, vector<1x1xf32>,
    %c0_16 = arith.constant 0 : index
    %c0_17 = arith.constant 0 : index
    %42 = vector.load %arg7[%c0_16, %c0_17] : memref<1x1xf32, #tpu.memory_space<vmem>>, vector<1x1xf32>
    %cst_18 = arith.constant 0.000000e+00 : f32
    %43 = vector.broadcast %cst_18 : f32 to vector<8x1xf32>
    %44 = arith.select %10, %31, %43 : vector<8x1xi1>, vector<8x1xf32>
    %45 = vector.shape_cast %44 : vector<8x1xf32> to vector<1x8x1xf32>
    %cst_19 = arith.constant dense<0.000000e+00> : vector<1xf32>
    %46 = vector.multi_reduction <add>, %45, %cst_19 [1, 2] : vector<1x8x1xf32> to vector<1xf32>
    %47 = vector.shape_cast %46 : vector<1xf32> to vector<1x1x1xf32>
    %48 = vector.extract %47[0, 0, 0] : f32 from vector<1x1x1xf32>
    %49 = vector.broadcast %48 : f32 to vector<1x1xf32>
    %50 = arith.addf %42, %49 : vector<1x1xf32>
    %c0_20 = arith.constant 0 : index
    %c0_21 = arith.constant 0 : index
    %51 = vector.load %arg7[%c0_20, %c0_21] : memref<1x1xf32, #tpu.memory_space<vmem>>, vector<1x1xf32>
    tpu.vector_store %arg7[%c0_20, %c0_21], %50 {strides = array<i32>} : memref<1x1xf32, #tpu.memory_space<vmem>>, vector<1x1xf32>,
    %c0_i32_22 = arith.constant 0 : i32
    %52 = arith.cmpi eq, %arg0, %c0_i32_22 : i32
    %53 = arith.extui %52 : i1 to i32
    %c0_i32_23 = arith.constant 0 : i32
    %54 = arith.cmpi ne, %53, %c0_i32_23 : i32
    scf.if %54 {
      %c0_24 = arith.constant 0 : index
      %c0_25 = arith.constant 0 : index
      %55 = vector.load %arg6[%c0_24, %c0_25] : memref<1x1xf32, #tpu.memory_space<vmem>>, vector<1x1xf32>
      %cst_26 = arith.constant 1.250000e-01 : f32
      %56 = vector.broadcast %cst_26 : f32 to vector<1x1xf32>
      %57 = arith.mulf %55, %56 : vector<1x1xf32>
      %c0_27 = arith.constant 0 : index
      %c0_28 = arith.constant 0 : index
      %58 = vector.load %arg7[%c0_27, %c0_28] : memref<1x1xf32, #tpu.memory_space<vmem>>, vector<1x1xf32>
      %cst_29 = arith.constant 1.250000e-01 : f32
      %59 = vector.broadcast %cst_29 : f32 to vector<1x1xf32>
      %60 = arith.mulf %58, %59 : vector<1x1xf32>
      %c0_30 = arith.constant 0 : index
      %c0_31 = arith.constant 0 : index
      %61 = vector.load %arg4[%c0_30, %c0_31] : memref<1x1xf32, #tpu.memory_space<vmem>>, vector<1x1xf32>
      tpu.vector_store %arg4[%c0_30, %c0_31], %57 {strides = array<i32>} : memref<1x1xf32, #tpu.memory_space<vmem>>, vector<1x1xf32>,
      %c0_32 = arith.constant 0 : index
      %c0_33 = arith.constant 0 : index
      %62 = vector.load %arg5[%c0_32, %c0_33] : memref<1x1xf32, #tpu.memory_space<vmem>>, vector<1x1xf32>
      tpu.vector_store %arg5[%c0_32, %c0_33], %60 {strides = array<i32>} : memref<1x1xf32, #tpu.memory_space<vmem>>, vector<1x1xf32>,
      %cst_34 = arith.constant 1.000000e-01 : f32
      %63 = vector.broadcast %cst_34 : f32 to vector<1x1xf32>
      %64 = arith.mulf %63, %57 : vector<1x1xf32>
      %65 = arith.addf %64, %60 : vector<1x1xf32>
      %c0_35 = arith.constant 0 : index
      %c0_36 = arith.constant 0 : index
      %66 = vector.load %arg3[%c0_35, %c0_36] : memref<1x1xf32, #tpu.memory_space<vmem>>, vector<1x1xf32>
      tpu.vector_store %arg3[%c0_35, %c0_36], %65 {strides = array<i32>} : memref<1x1xf32, #tpu.memory_space<vmem>>, vector<1x1xf32>,
    } else {
    }
    return
  }
  func.func @transform_0(%arg0: i32) -> (i32, i32) {
    %c0_i32 = arith.constant 0 : i32
    %c0_i32_0 = arith.constant 0 : i32
    return %arg0, %c0_i32 : i32, i32
  }
  func.func @transform_1(%arg0: i32) -> (i32, i32) {
    %c0_i32 = arith.constant 0 : i32
    %c0_i32_0 = arith.constant 0 : i32
    return %arg0, %c0_i32 : i32, i32
  }
  func.func @transform_2(%arg0: i32) -> (i32, i32) {
    %c0_i32 = arith.constant 0 : i32
    %c0_i32_0 = arith.constant 0 : i32
    %c0_i32_1 = arith.constant 0 : i32
    return %c0_i32, %c0_i32_0 : i32, i32
  }
  func.func @transform_3(%arg0: i32) -> (i32, i32) {
    %c0_i32 = arith.constant 0 : i32
    %c0_i32_0 = arith.constant 0 : i32
    %c0_i32_1 = arith.constant 0 : i32
    return %c0_i32, %c0_i32_0 : i32, i32
  }
  func.func @transform_4(%arg0: i32) -> (i32, i32) {
    %c0_i32 = arith.constant 0 : i32
    %c0_i32_0 = arith.constant 0 : i32
    %c0_i32_1 = arith.constant 0 : i32
    return %c0_i32, %c0_i32_0 : i32, i32
  }
}

</mosaic_0001>

<llo_original>
// kernel: tpu_custom_call.1
$region0: #{tpu_custom_call.1}
  #allocation0 [shape = 'u32[]', space=smem, size = 0x4, offset = 0x4, fixed_abs, tag = 'smem constant byte address 0x4 - core index']
  #allocation1 [shape = 'u32[144,128]{1,0:T(1,128)}', space=vmem, size = 0x12000, scoped, tag = 'internal scratch']
  #allocation2 [shape = 'f32[1,1]{1,0:T(1,128)}', space=vmem, size = 0x200, scoped, tag = 'scratch operand']
  #allocation3 [shape = 'f32[1,1]{1,0:T(1,128)}', space=vmem, size = 0x200, scoped, tag = 'scratch operand']
  %s0 = inlined_call_operand.vmem [shape: f32[8,4], index: 0, kind: input, shape index: {}]
  %s1 = inlined_call_operand.vmem [shape: s32[8,1], index: 1, kind: input, shape index: {}]
  %s2 = inlined_call_operand.hbm [shape: f32[1,1], index: 2, kind: output, shape index: {0}]
  %s3 = inlined_call_operand.hbm [shape: f32[1,1], index: 3, kind: output, shape index: {1}]
  %s4 = inlined_call_operand.hbm [shape: f32[1,1], index: 4, kind: output, shape index: {2}]
  %5 = xla_tuple %s2, %s3, %s4
  %s6 = sld [smem:[#allocation0]]
  $region42: #{tpu_custom_call.1} parent=0
    _
  %s8 = ssub.s32 1, %s6
  %s9 = scalar_select 0, %s8, %s6
  $region1: #{tpu_custom_call.1} parent=0
    #allocation4 [shape = 'u8[512]{0}', space=vmem, size = 0x400, scoped, tag = 'output window, operand 0, single buffered']
    #allocation5 [shape = 's32[1]{0}', space=sflag, size = 0x4, scoped, tag = 'scoped memory for tpu_custom_call.1']
    #allocation6 [shape = 'u8[512]{0}', space=vmem, size = 0x400, scoped, tag = 'output window, operand 1, single buffered']
    #allocation7 [shape = 's32[1]{0}', space=sflag, size = 0x4, scoped, tag = 'scoped memory for tpu_custom_call.1']
    #allocation8 [shape = 'u8[512]{0}', space=vmem, size = 0x400, scoped, tag = 'output window, operand 2, single buffered']
    %10 = vsyncpa [#allocation5], 0
    %11 = vsyncpa [#allocation7], 0
    // Predicated region
    $region2: #{tpu_custom_call.1} parent=1 // pred_check
      _
    $region3: #{tpu_custom_call.1} parent=1 // pred_check_branch
      %13 = sbr.rel (0) target = $region5
    $region4: #{tpu_custom_call.1} parent=1 // pred_region
      _
    $region5: #{tpu_custom_call.1} parent=1 // pred_fallthru
      _
    // Predicated region
    $region6: #{tpu_custom_call.1} parent=1 // pred_check
      _
    $region7: #{tpu_custom_call.1} parent=1 // pred_check_branch
      %15 = sbr.rel (0) target = $region9
    $region8: #{tpu_custom_call.1} parent=1 // pred_region
      _
    $region9: #{tpu_custom_call.1} parent=1 // pred_fallthru
      _
    %p16 = scmp.eq.s32.totalorder 0, 0
    // Predicated region
    $region10: #{tpu_custom_call.1} parent=1 // pred_check
      %p17 = pneg %p16
    $region11: #{tpu_custom_call.1} parent=1 // pred_check_branch
      %19 = sbr.rel (%p17) target = $region13
    $region12: #{tpu_custom_call.1} parent=1 // pred_region
      %vm20 = vcmask 0
      %21 = vst.msk [vmem:[#allocation2] sm:$0x1] %vm20, 0.0
      %22 = vst.msk [vmem:[#allocation3] sm:$0x1] %vm20, 0.0
    $region13: #{tpu_custom_call.1} parent=1 // pred_fallthru
      _
    %v23 = vld [vmem:[%s0] sm:$0xff]
    %v24 = vld [vmem:[%s1] sm:$0xff]
    %s25 = smul.u32 0, 8
    %v26 = vlaneseq
    %v27 = vshrl.u32 %v26, 7
    %v28 = vstv %s25
    %v29 = vadd.s32 %v28, %v27
    %vm30 = vcmp.lt.s32.totalorder %v29, 8
    %v31 = vsel %vm30, 1, 0
    %vm32 = vcmp.eq.s32.totalorder %v31, 1
    %v33 = vsel %vm32, %v23, 0.0
    %v34 = vlaneseq
    %v35 = vand.u32 %v34, 127
    %36 = vset.pattern.permute.xlu0 0
    %37 = vperm.xlu0 %36, %v24
    %v38 = vpop.permute.xlu0 %37
    %vm39 = vcmp.eq.s32.totalorder %v35, %v38
    %v40 = vsel %vm39, %v33, 0.0
    %vm41 = vcmask 31744
    %v42 = vsel %vm41, %v40, 0.0
    %43 = vadd.xlane.f32.xlu0 %v42
    %v44 = vpop.xlane.xlu0 %43
    %v45 = vsub.f32 %v44, %v33
    %v46 = vmul.f32 %v45, 1.442695
    %v47 = vpow.pop %v46
    %v48 = vsel %vm41, %v47, 0.0
    %49 = vadd.xlane.f32.xlu0 %v48
    %v50 = vpop.xlane.xlu0 %49
    %v51 = vsub.f32 %v50, 1.0
    %v52 = vadd.f32 %v51, 1.0
    %v53 = vlog2.pop %v52
    %v54 = vmul.f32 %v53, 0.6931472
    %v55 = vld [vmem:[#allocation2] sm:$0x1]
    %v56 = vsel %vm30, %v44, 0.0
    %vm57 = vcmask 7168
    %v58 = vsel %vm57, %v56, 0.0
    %59 = vadd.xlane.f32.xlu0 %v58
    %v60 = vpop.xlane.xlu0 %59
    %v61 = vrot.slane %v60, 4
    %v62 = vadd.f32 %v60, %v61
    %v63 = vrot.slane %v62, 2
    %v64 = vadd.f32 %v62, %v63
    %v65 = vrot.slane %v64, 1
    %v66 = vadd.f32 %v64, %v65
    %s67 = vtos %v66
    %v68 = vstv %s67
    %v69 = vadd.f32 %v55, %v68
    %vm70 = vcmask 0
    %71 = vst.msk [vmem:[#allocation2] sm:$0x1] %vm70, %v69
    %v72 = vld [vmem:[#allocation3] sm:$0x1]
    %v73 = vsel %vm30, %v54, 0.0
    %v74 = vsel %vm57, %v73, 0.0
    %75 = vadd.xlane.f32.xlu0 %v74
    %v76 = vpop.xlane.xlu0 %75
    %v77 = vrot.slane %v76, 4
    %v78 = vadd.f32 %v76, %v77
    %v79 = vrot.slane %v78, 2
    %v80 = vadd.f32 %v78, %v79
    %v81 = vrot.slane %v80, 1
    %v82 = vadd.f32 %v80, %v81
    %s83 = vtos %v82
    %v84 = vstv %s83
    %v85 = vadd.f32 %v72, %v84
    %86 = vst.msk [vmem:[#allocation3] sm:$0x1] %vm70, %v85
    // Predicated region
    $region14: #{tpu_custom_call.1} parent=1 // pred_check
      %p87 = pneg %p16
    $region15: #{tpu_custom_call.1} parent=1 // pred_check_branch
      %89 = sbr.rel (%p87) target = $region17
    $region16: #{tpu_custom_call.1} parent=1 // pred_region
      %v90 = vld [vmem:[#allocation2] sm:$0x1]
      %v91 = vmul.f32 %v90, 0.125
      %v92 = vld [vmem:[#allocation3] sm:$0x1]
      %v93 = vmul.f32 %v92, 0.125
      %94 = vst.msk [vmem:[#allocation6] sm:$0x1] %vm70, %v91
      %95 = vst.msk [vmem:[#allocation8] sm:$0x1] %vm70, %v93
      %v96 = vmul.f32 %v91, 0.1
      %v97 = vadd.f32 %v96, %v93
      %98 = vst.msk [vmem:[#allocation4] sm:$0x1] %vm70, %v97
    $region17: #{tpu_custom_call.1} parent=1 // pred_fallthru
      _
    // Predicated region
    $region18: #{tpu_custom_call.1} parent=1 // pred_check
      _
    $region19: #{tpu_custom_call.1} parent=1 // pred_check_branch
      %100 = sbr.rel (0) target = $region21
    $region20: #{tpu_custom_call.1} parent=1 // pred_region
      %s102 = ssub.s32 16, 16
      %103 = vsyncadd [#allocation5], %s102
      %s105 = sshll.u32 [#allocation4], 4
      %s106 = int_to_ptr.vmem [resolvable:$true] %s105
      %108 = dma.vmem_to_hbm [thread:$0]  %s106, 16, %s2, [#allocation5]
    $region21: #{tpu_custom_call.1} parent=1 // pred_fallthru
      _
    // Predicated region
    $region22: #{tpu_custom_call.1} parent=1 // pred_check
      _
    $region23: #{tpu_custom_call.1} parent=1 // pred_check_branch
      %110 = sbr.rel (0) target = $region25
    $region24: #{tpu_custom_call.1} parent=1 // pred_region
      %s112 = ssub.s32 16, 16
      %113 = vsyncadd [#allocation7], %s112
      %s115 = sshll.u32 [#allocation6], 4
      %s116 = int_to_ptr.vmem [resolvable:$true] %s115
      %118 = dma.vmem_to_hbm [thread:$0]  %s116, 16, %s3, [#allocation7]
    $region25: #{tpu_custom_call.1} parent=1 // pred_fallthru
      _
    // Predicated region
    $region26: #{tpu_custom_call.1} parent=1 // pred_check
      _
    $region27: #{tpu_custom_call.1} parent=1 // pred_check_branch
      %120 = sbr.rel (0) target = $region29
    $region28: #{tpu_custom_call.1} parent=1 // pred_region
      %s122 = ssub.s32 16, 16
      %123 = vsyncadd [#allocation7], %s122
      %s125 = sshll.u32 [#allocation8], 4
      %s126 = int_to_ptr.vmem [resolvable:$true] %s125
      %128 = dma.vmem_to_hbm [thread:$0]  %s126, 16, %s4, [#allocation7]
    $region29: #{tpu_custom_call.1} parent=1 // pred_fallthru
      _
    // Predicated region
    $region30: #{tpu_custom_call.1} parent=1 // pred_check
      _
    $region31: #{tpu_custom_call.1} parent=1 // pred_check_branch
      %130 = sbr.rel (0) target = $region33
    $region32: #{tpu_custom_call.1} parent=1 // pred_region
      %131 = dma.done [#allocation5], 16
    $region33: #{tpu_custom_call.1} parent=1 // pred_fallthru
      _
    // Predicated region
    $region34: #{tpu_custom_call.1} parent=1 // pred_check
      _
    $region35: #{tpu_custom_call.1} parent=1 // pred_check_branch
      %133 = sbr.rel (0) target = $region37
    $region36: #{tpu_custom_call.1} parent=1 // pred_region
      %134 = dma.done [#allocation7], 16
    $region37: #{tpu_custom_call.1} parent=1 // pred_fallthru
      _
    // Predicated region
    $region38: #{tpu_custom_call.1} parent=1 // pred_check
      _
    $region39: #{tpu_custom_call.1} parent=1 // pred_check_branch
      %136 = sbr.rel (0) target = $region41
    $region40: #{tpu_custom_call.1} parent=1 // pred_region
      %137 = dma.done [#allocation7], 16
    $region41: #{tpu_custom_call.1} parent=1 // pred_fallthru
      _
    %138 = vsyncpa [#allocation5], 1
    %139 = vsyncpa [#allocation7], 1

</llo_original>
